<compile_context>
chip_gen: v5e
topology: v5e:2x2
jax: 0.10.0
libtpu: 0.0.40
codegen_flags: <defaults>
</compile_context>

<pallas_src>
import functools

import jax
import jax.numpy as jnp
from jax.experimental import pallas as pl
from jax.experimental.pallas import tpu as pltpu


def mirror_critic_kernel(s_ref, a_ref, w1s_ref, w1a_ref, b1_ref,
                         w2_ref, b2_ref, wr_ref, br_ref, qt_ref):
    """Fused two-head critic MLP; output written transposed (2, tb)."""
    h = (jnp.dot(s_ref[...], w1s_ref[...], preferred_element_type=jnp.float32)
         + jnp.dot(a_ref[...], w1a_ref[...], preferred_element_type=jnp.float32)
         + b1_ref[...])
    h = jnp.maximum(h, 0.0)
    h = jnp.dot(h, w2_ref[...], preferred_element_type=jnp.float32) + b2_ref[...]
    h = jnp.maximum(h, 0.0)
    q = jnp.dot(h, wr_ref[...], preferred_element_type=jnp.float32) + br_ref[...]
    # (tb, 2) -> (2, tb): XLU transpose; lane-dense (unmasked) vector store.
    qt_ref[...] = q.T


def init_linear(key, in_dim, out_dim):
    """PyTorch-style uniform(-1/sqrt(fan_in), 1/sqrt(fan_in)) init.

    Weight returned as (in_dim, out_dim) (transpose of torch's (out, in)).
    """
    kw, kb = jax.random.split(key)
    bound = 1.0 / jnp.sqrt(jnp.float32(in_dim))
    w = jax.random.uniform(kw, (in_dim, out_dim), jnp.float32, -bound, bound)
    b = jax.random.uniform(kb, (1, out_dim), jnp.float32, -bound, bound)
    return w, b


def make_mirror_masks(state_dim, action_dim):
    # TODO(synk): stand-in for the unavailable create_mirror_masks():
    # deterministic alternating +1 / -1 per feature.
    smask = jnp.where(jnp.arange(state_dim) % 2 == 0, 1.0, -1.0).astype(jnp.float32)
    amask = jnp.where(jnp.arange(action_dim) % 2 == 0, 1.0, -1.0).astype(jnp.float32)
    return smask, amask


def pack_params(params, smask, amask):
    """Host-side repack: fold masks into layer-1 weights, fuse both Q heads.

    Returns (W1s (sd,2H), W1a (ad,2H), b1 (1,2H), W2 block-diag (2H,2H),
    b2 (1,2H), Wr (2H,2), br (1,2)).
    """
    (w11, b11, w12, b12, w1r, b1r,
     w21, b21, w22, b22, w2r, b2r) = params
    H = w12.shape[0]
    sd = smask.shape[0]
    # Split layer-1 weights into state rows / action rows, stack the two heads
    # along the output axis, and fold the mirror signs into the rows.
    w1s = smask[:, None] * jnp.concatenate([w11[:sd], w21[:sd]], axis=1)   # (sd, 2H)
    w1a = amask[:, None] * jnp.concatenate([w11[sd:], w21[sd:]], axis=1)   # (ad, 2H)
    b1 = jnp.concatenate([b11, b21], axis=1)                               # (1, 2H)
    w2 = jnp.zeros((2 * H, 2 * H), jnp.float32)
    w2 = w2.at[:H, :H].set(w12).at[H:, H:].set(w22)                        # block-diag
    b2 = jnp.concatenate([b12, b22], axis=1)                               # (1, 2H)
    wr = jnp.zeros((2 * H, 2), jnp.float32)
    wr = wr.at[:H, 0:1].set(w1r).at[H:, 1:2].set(w2r)                      # (2H, 2)
    br = jnp.concatenate([b1r, b2r], axis=1)                               # (1, 2)
    return w1s, w1a, b1, w2, b2, wr, br


@functools.partial(jax.jit, static_argnames=("batch_tile", "stream_dtype"))
def mirror_critic_forward(s, a, packed, *, batch_tile=2048,
                          stream_dtype=jnp.float32):
    w1s, w1a, b1, w2, b2, wr, br = packed
    B, sd = s.shape
    ad = a.shape[1]
    H2 = w2.shape[0]

    # Optional bf16 streaming of the dominant HBM traffic (activations) and the
    # matching layer-1 weights; accumulation / bias / ReLU stay f32 in-kernel.
    if stream_dtype != jnp.float32:
        s = s.astype(stream_dtype)
        a = a.astype(stream_dtype)
        w1s = w1s.astype(stream_dtype)
        w1a = w1a.astype(stream_dtype)

    # Tile selection: big tiles to amortize per-step pipeline overhead, but for
    # moderate/large B keep >= 2 tiles so the "parallel" batch axis can shard
    # across the two v7x TensorCores.  No padding: grid = cdiv(B, tb) and
    # Pallas masks the tail block.
    if B <= 512:
        tb = B
        grid_b = 1
    else:
        tb = min(batch_tile, pl.cdiv(B, 2))
        tb = max(128, (tb // 128) * 128)   # multiple of 128: lane-dense out tile
        grid_b = pl.cdiv(B, tb)

    qt = pl.pallas_call(
        mirror_critic_kernel,
        out_shape=jax.ShapeDtypeStruct((2, B), jnp.float32),
        grid_spec=pltpu.PrefetchScalarGridSpec(
            num_scalar_prefetch=0,
            grid=(grid_b,),
            in_specs=[
                pl.BlockSpec((tb, sd), lambda i: (i, 0)),    # s streams
                pl.BlockSpec((tb, ad), lambda i: (i, 0)),    # a streams
                pl.BlockSpec((sd, H2), lambda i: (0, 0)),    # weights resident
                pl.BlockSpec((ad, H2), lambda i: (0, 0)),
                pl.BlockSpec((1, H2), lambda i: (0, 0)),
                pl.BlockSpec((H2, H2), lambda i: (0, 0)),
                pl.BlockSpec((1, H2), lambda i: (0, 0)),
                pl.BlockSpec((H2, 2), lambda i: (0, 0)),
                pl.BlockSpec((1, 2), lambda i: (0, 0)),
            ],
            # Lane-dense transposed output: batch on lanes.
            out_specs=pl.BlockSpec((2, tb), lambda i: (0, i)),
        ),
        compiler_params=pltpu.CompilerParams(
            dimension_semantics=("parallel",),
            vmem_limit_bytes=48 * 1024 * 1024,
        ),
    )(s, a, w1s, w1a, b1, w2, b2, wr, br)

    q1 = qt[0:1, :].T   # (B, 1)
    q2 = qt[1:2, :].T   # (B, 1)
    return q1, q2


if __name__ == "__main__":
    state_dim, action_dim, hidden_width = 12, 4, 32
    batch = 8

    key = jax.random.PRNGKey(0)
    keys = jax.random.split(key, 8)

    # Parameters (deterministic, synthetic).
    w11, b11 = init_linear(keys[0], state_dim + action_dim, hidden_width)
    w12, b12 = init_linear(keys[1], hidden_width, hidden_width)
    w1r, b1r = init_linear(keys[2], hidden_width, 1)
    w21, b21 = init_linear(keys[3], state_dim + action_dim, hidden_width)
    w22, b22 = init_linear(keys[4], hidden_width, hidden_width)
    w2r, b2r = init_linear(keys[5], hidden_width, 1)
    params = (w11, b11, w12, b12, w1r, b1r, w21, b21, w22, b22, w2r, b2r)

    # Example inputs.
    s = jax.random.normal(keys[6], (batch, state_dim), jnp.float32)
    a = jax.random.normal(keys[7], (batch, action_dim), jnp.float32)

    smask, amask = make_mirror_masks(state_dim, action_dim)
    packed = pack_params(params, smask, amask)

    q1, q2 = mirror_critic_forward(s, a, packed)
    jax.block_until_ready((q1, q2))

    # Pure-JAX reference of the original math (mask -> concat -> two MLP heads).
    sa_ref = jnp.concatenate([s * smask[None, :], a * amask[None, :]], axis=1)
    h1 = jnp.maximum(sa_ref @ w11 + b11, 0.0)
    h1 = jnp.maximum(h1 @ w12 + b12, 0.0)
    q1_ref = h1 @ w1r + b1r
    h2 = jnp.maximum(sa_ref @ w21 + b21, 0.0)
    h2 = jnp.maximum(h2 @ w22 + b22, 0.0)
    q2_ref = h2 @ w2r + b2r

    assert q1.shape == (batch, 1) and q2.shape == (batch, 1)
    assert jnp.allclose(q1, q1_ref, atol=1e-5), "q1 mismatch"
    assert jnp.allclose(q2, q2_ref, atol=1e-5), "q2 mismatch"

    print("KERNEL_OK")
</pallas_src>

<mosaic_0001>
module attributes {stable_mosaic.version = 11 : i64} {
  func.func @mirror_critic_kernel(%arg0: i32, %arg1: memref<8x12xf32, #tpu.memory_space<vmem>>, %arg2: memref<8x4xf32, #tpu.memory_space<vmem>>, %arg3: memref<12x64xf32, #tpu.memory_space<vmem>>, %arg4: memref<4x64xf32, #tpu.memory_space<vmem>>, %arg5: memref<1x64xf32, #tpu.memory_space<vmem>>, %arg6: memref<64x64xf32, #tpu.memory_space<vmem>>, %arg7: memref<1x64xf32, #tpu.memory_space<vmem>>, %arg8: memref<64x2xf32, #tpu.memory_space<vmem>>, %arg9: memref<1x2xf32, #tpu.memory_space<vmem>>, %arg10: memref<2x8xf32, #tpu.memory_space<vmem>>) attributes {dimension_semantics = [#tpu.dimension_semantics<parallel>], iteration_bounds = array<i64: 1>, scalar_prefetch = 0 : i64, scratch_operands = 0 : i64, tpu.core_type = #tpu.core_type<tc>, window_params = [{transform_indices = @transform_0, window_bounds = array<i64: 8, 12>}, {transform_indices = @transform_1, window_bounds = array<i64: 8, 4>}, {pipeline_mode = #tpu.pipeline_mode<synchronous>, transform_indices = @transform_2, window_bounds = array<i64: 12, 64>}, {pipeline_mode = #tpu.pipeline_mode<synchronous>, transform_indices = @transform_3, window_bounds = array<i64: 4, 64>}, {pipeline_mode = #tpu.pipeline_mode<synchronous>, transform_indices = @transform_4, window_bounds = array<i64: 1, 64>}, {pipeline_mode = #tpu.pipeline_mode<synchronous>, transform_indices = @transform_5, window_bounds = array<i64: 64, 64>}, {pipeline_mode = #tpu.pipeline_mode<synchronous>, transform_indices = @transform_6, window_bounds = array<i64: 1, 64>}, {pipeline_mode = #tpu.pipeline_mode<synchronous>, transform_indices = @transform_7, window_bounds = array<i64: 64, 2>}, {pipeline_mode = #tpu.pipeline_mode<synchronous>, transform_indices = @transform_8, window_bounds = array<i64: 1, 2>}, {transform_indices = @transform_9, window_bounds = array<i64: 2, 8>}]} {
    %c0 = arith.constant 0 : index
    %c0_0 = arith.constant 0 : index
    %0 = vector.load %arg1[%c0, %c0_0] : memref<8x12xf32, #tpu.memory_space<vmem>>, vector<8x12xf32>
    %c0_1 = arith.constant 0 : index
    %c0_2 = arith.constant 0 : index
    %1 = vector.load %arg3[%c0_1, %c0_2] : memref<12x64xf32, #tpu.memory_space<vmem>>, vector<12x64xf32>
    %cst = arith.constant dense<0.000000e+00> : vector<8x64xf32>
    %2 = tpu.matmul %0, %1, %cst {dimension_numbers = #tpu.dot_dimension_numbers<[1], [0], [0], [1], [0, 0, 1, 1], [], []>} : vector<8x12xf32>, vector<12x64xf32>, vector<8x64xf32> -> vector<8x64xf32>
    %c0_3 = arith.constant 0 : index
    %c0_4 = arith.constant 0 : index
    %3 = vector.load %arg2[%c0_3, %c0_4] : memref<8x4xf32, #tpu.memory_space<vmem>>, vector<8x4xf32>
    %c0_5 = arith.constant 0 : index
    %c0_6 = arith.constant 0 : index
    %4 = vector.load %arg4[%c0_5, %c0_6] : memref<4x64xf32, #tpu.memory_space<vmem>>, vector<4x64xf32>
    %cst_7 = arith.constant dense<0.000000e+00> : vector<8x64xf32>
    %5 = tpu.matmul %3, %4, %cst_7 {dimension_numbers = #tpu.dot_dimension_numbers<[1], [0], [0], [1], [0, 0, 1, 1], [], []>} : vector<8x4xf32>, vector<4x64xf32>, vector<8x64xf32> -> vector<8x64xf32>
    %6 = arith.addf %2, %5 : vector<8x64xf32>
    %c0_8 = arith.constant 0 : index
    %c0_9 = arith.constant 0 : index
    %7 = vector.load %arg5[%c0_8, %c0_9] : memref<1x64xf32, #tpu.memory_space<vmem>>, vector<1x64xf32>
    %8 = vector.broadcast %7 : vector<1x64xf32> to vector<8x64xf32>
    %9 = arith.addf %6, %8 : vector<8x64xf32>
    %cst_10 = arith.constant 0.000000e+00 : f32
    %10 = vector.broadcast %cst_10 : f32 to vector<8x64xf32>
    %11 = arith.maximumf %9, %10 : vector<8x64xf32>
    %c0_11 = arith.constant 0 : index
    %c0_12 = arith.constant 0 : index
    %12 = vector.load %arg6[%c0_11, %c0_12] : memref<64x64xf32, #tpu.memory_space<vmem>>, vector<64x64xf32>
    %cst_13 = arith.constant dense<0.000000e+00> : vector<8x64xf32>
    %13 = tpu.matmul %11, %12, %cst_13 {dimension_numbers = #tpu.dot_dimension_numbers<[1], [0], [0], [1], [0, 0, 1, 1], [], []>} : vector<8x64xf32>, vector<64x64xf32>, vector<8x64xf32> -> vector<8x64xf32>
    %c0_14 = arith.constant 0 : index
    %c0_15 = arith.constant 0 : index
    %14 = vector.load %arg7[%c0_14, %c0_15] : memref<1x64xf32, #tpu.memory_space<vmem>>, vector<1x64xf32>
    %15 = vector.broadcast %14 : vector<1x64xf32> to vector<8x64xf32>
    %16 = arith.addf %13, %15 : vector<8x64xf32>
    %cst_16 = arith.constant 0.000000e+00 : f32
    %17 = vector.broadcast %cst_16 : f32 to vector<8x64xf32>
    %18 = arith.maximumf %16, %17 : vector<8x64xf32>
    %c0_17 = arith.constant 0 : index
    %c0_18 = arith.constant 0 : index
    %19 = vector.load %arg8[%c0_17, %c0_18] : memref<64x2xf32, #tpu.memory_space<vmem>>, vector<64x2xf32>
    %cst_19 = arith.constant dense<0.000000e+00> : vector<8x2xf32>
    %20 = tpu.matmul %18, %19, %cst_19 {dimension_numbers = #tpu.dot_dimension_numbers<[1], [0], [0], [1], [0, 0, 1, 1], [], []>} : vector<8x64xf32>, vector<64x2xf32>, vector<8x2xf32> -> vector<8x2xf32>
    %c0_20 = arith.constant 0 : index
    %c0_21 = arith.constant 0 : index
    %21 = vector.load %arg9[%c0_20, %c0_21] : memref<1x2xf32, #tpu.memory_space<vmem>>, vector<1x2xf32>
    %22 = vector.broadcast %21 : vector<1x2xf32> to vector<8x2xf32>
    %23 = arith.addf %20, %22 : vector<8x2xf32>
    %24 = tpu.transpose %23, [1, 0] : vector<8x2xf32> -> vector<2x8xf32>
    %c0_22 = arith.constant 0 : index
    %c0_23 = arith.constant 0 : index
    %25 = vector.load %arg10[%c0_22, %c0_23] : memref<2x8xf32, #tpu.memory_space<vmem>>, vector<2x8xf32>
    tpu.vector_store %arg10[%c0_22, %c0_23], %24 {strides = array<i32>} : memref<2x8xf32, #tpu.memory_space<vmem>>, vector<2x8xf32>,
    return
  }
  func.func @transform_0(%arg0: i32) -> (i32, i32) {
    %c0_i32 = arith.constant 0 : i32
    %c0_i32_0 = arith.constant 0 : i32
    return %arg0, %c0_i32 : i32, i32
  }
  func.func @transform_1(%arg0: i32) -> (i32, i32) {
    %c0_i32 = arith.constant 0 : i32
    %c0_i32_0 = arith.constant 0 : i32
    return %arg0, %c0_i32 : i32, i32
  }
  func.func @transform_2(%arg0: i32) -> (i32, i32) {
    %c0_i32 = arith.constant 0 : i32
    %c0_i32_0 = arith.constant 0 : i32
    %c0_i32_1 = arith.constant 0 : i32
    return %c0_i32, %c0_i32_0 : i32, i32
  }
  func.func @transform_3(%arg0: i32) -> (i32, i32) {
    %c0_i32 = arith.constant 0 : i32
    %c0_i32_0 = arith.constant 0 : i32
    %c0_i32_1 = arith.constant 0 : i32
    return %c0_i32, %c0_i32_0 : i32, i32
  }
  func.func @transform_4(%arg0: i32) -> (i32, i32) {
    %c0_i32 = arith.constant 0 : i32
    %c0_i32_0 = arith.constant 0 : i32
    %c0_i32_1 = arith.constant 0 : i32
    return %c0_i32, %c0_i32_0 : i32, i32
  }
  func.func @transform_5(%arg0: i32) -> (i32, i32) {
    %c0_i32 = arith.constant 0 : i32
    %c0_i32_0 = arith.constant 0 : i32
    %c0_i32_1 = arith.constant 0 : i32
    return %c0_i32, %c0_i32_0 : i32, i32
  }
  func.func @transform_6(%arg0: i32) -> (i32, i32) {
    %c0_i32 = arith.constant 0 : i32
    %c0_i32_0 = arith.constant 0 : i32
    %c0_i32_1 = arith.constant 0 : i32
    return %c0_i32, %c0_i32_0 : i32, i32
  }
  func.func @transform_7(%arg0: i32) -> (i32, i32) {
    %c0_i32 = arith.constant 0 : i32
    %c0_i32_0 = arith.constant 0 : i32
    %c0_i32_1 = arith.constant 0 : i32
    return %c0_i32, %c0_i32_0 : i32, i32
  }
  func.func @transform_8(%arg0: i32) -> (i32, i32) {
    %c0_i32 = arith.constant 0 : i32
    %c0_i32_0 = arith.constant 0 : i32
    %c0_i32_1 = arith.constant 0 : i32
    return %c0_i32, %c0_i32_0 : i32, i32
  }
  func.func @transform_9(%arg0: i32) -> (i32, i32) {
    %c0_i32 = arith.constant 0 : i32
    %c0_i32_0 = arith.constant 0 : i32
    return %c0_i32, %arg0 : i32, i32
  }
}

</mosaic_0001>

<llo_original>
// kernel: mirror_critic_forward.1
$region0: #{mirror_critic_forward.1}
  #allocation0 [shape = 'u32[]', space=smem, size = 0x4, offset = 0x4, fixed_abs, tag = 'smem constant byte address 0x4 - core index']
  #allocation1 [shape = 'u32[72,128]{1,0:T(1,128)}', space=vmem, size = 0x9000, scoped, tag = 'internal scratch']
  %s0 = inlined_call_operand.vmem [shape: f32[8,12], index: 0, kind: input, shape index: {}]
  %s1 = inlined_call_operand.vmem [shape: f32[8,4], index: 1, kind: input, shape index: {}]
  %s2 = inlined_call_operand.hbm [shape: f32[12,64], index: 2, kind: input, shape index: {}]
  %s3 = inlined_call_operand.vmem [shape: f32[4,64], index: 3, kind: input, shape index: {}]
  %s4 = inlined_call_operand.vmem [shape: f32[1,64], index: 4, kind: input, shape index: {}]
  %s5 = inlined_call_operand.vmem [shape: f32[64,64], index: 5, kind: input, shape index: {}]
  %s6 = inlined_call_operand.vmem [shape: f32[1,64], index: 6, kind: input, shape index: {}]
  %s7 = inlined_call_operand.vmem [shape: f32[64,2], index: 7, kind: input, shape index: {}]
  %s8 = inlined_call_operand.vmem [shape: f32[1,2], index: 8, kind: input, shape index: {}]
  %s9 = inlined_call_operand.vmem [shape: f32[2,8], index: 9, kind: output, shape index: {}]
  %s10 = sld [smem:[#allocation0]]
  $region50: #{mirror_critic_forward.1} parent=0
    _
  %s12 = ssub.s32 1, %s10
  %s13 = scalar_select 0, %s12, %s10
  $region1: #{mirror_critic_forward.1} parent=0
    #allocation2 [shape = 'u8[8192]{0}', space=vmem, size = 0x2000, scoped, tag = 'input window, operand 2, single buffered']
    #allocation3 [shape = 's32[1]{0}', space=sflag, size = 0x4, scoped, tag = 'scoped memory for mirror_critic_forward.1']
    %14 = vsyncpa [#allocation3], 0
    // Predicated region
    $region2: #{mirror_critic_forward.1} parent=1 // pred_check
      _
    $region3: #{mirror_critic_forward.1} parent=1 // pred_check_branch
      %16 = sbr.rel (0) target = $region5
    $region4: #{mirror_critic_forward.1} parent=1 // pred_region
      _
    $region5: #{mirror_critic_forward.1} parent=1 // pred_fallthru
      _
    // Predicated region
    $region6: #{mirror_critic_forward.1} parent=1 // pred_check
      _
    $region7: #{mirror_critic_forward.1} parent=1 // pred_check_branch
      %18 = sbr.rel (0) target = $region9
    $region8: #{mirror_critic_forward.1} parent=1 // pred_region
      _
    $region9: #{mirror_critic_forward.1} parent=1 // pred_fallthru
      _
    // Predicated region
    $region10: #{mirror_critic_forward.1} parent=1 // pred_check
      _
    $region11: #{mirror_critic_forward.1} parent=1 // pred_check_branch
      %20 = sbr.rel (0) target = $region13
    $region12: #{mirror_critic_forward.1} parent=1 // pred_region
      %22 = vsyncadd [#allocation3], 0
      %s23 = sshll.u32 %s2, 4
      %s24 = int_to_ptr.hbm [resolvable:$true] %s23
      %s25 = sshll.u32 [#allocation2], 4
      %s26 = int_to_ptr.vmem [resolvable:$true] %s25
      %31 = dma.hbm_to_vmem [thread:$0]  %s24, 256, %s26, [#allocation3], 128, 128, 8
    $region13: #{mirror_critic_forward.1} parent=1 // pred_fallthru
      _
    // Predicated region
    $region14: #{mirror_critic_forward.1} parent=1 // pred_check
      _
    $region15: #{mirror_critic_forward.1} parent=1 // pred_check_branch
      %33 = sbr.rel (0) target = $region17
    $region16: #{mirror_critic_forward.1} parent=1 // pred_region
      _
    $region17: #{mirror_critic_forward.1} parent=1 // pred_fallthru
      _
    // Predicated region
    $region18: #{mirror_critic_forward.1} parent=1 // pred_check
      _
    $region19: #{mirror_critic_forward.1} parent=1 // pred_check_branch
      %35 = sbr.rel (0) target = $region21
    $region20: #{mirror_critic_forward.1} parent=1 // pred_region
      _
    $region21: #{mirror_critic_forward.1} parent=1 // pred_fallthru
      _
    // Predicated region
    $region22: #{mirror_critic_forward.1} parent=1 // pred_check
      _
    $region23: #{mirror_critic_forward.1} parent=1 // pred_check_branch
      %37 = sbr.rel (0) target = $region25
    $region24: #{mirror_critic_forward.1} parent=1 // pred_region
      _
    $region25: #{mirror_critic_forward.1} parent=1 // pred_fallthru
      _
    // Predicated region
    $region26: #{mirror_critic_forward.1} parent=1 // pred_check
      _
    $region27: #{mirror_critic_forward.1} parent=1 // pred_check_branch
      %39 = sbr.rel (0) target = $region29
    $region28: #{mirror_critic_forward.1} parent=1 // pred_region
      _
    $region29: #{mirror_critic_forward.1} parent=1 // pred_fallthru
      _
    // Predicated region
    $region30: #{mirror_critic_forward.1} parent=1 // pred_check
      _
    $region31: #{mirror_critic_forward.1} parent=1 // pred_check_branch
      %41 = sbr.rel (0) target = $region33
    $region32: #{mirror_critic_forward.1} parent=1 // pred_region
      _
    $region33: #{mirror_critic_forward.1} parent=1 // pred_fallthru
      _
    // Predicated region
    $region34: #{mirror_critic_forward.1} parent=1 // pred_check
      _
    $region35: #{mirror_critic_forward.1} parent=1 // pred_check_branch
      %43 = sbr.rel (0) target = $region37
    $region36: #{mirror_critic_forward.1} parent=1 // pred_region
      _
    $region37: #{mirror_critic_forward.1} parent=1 // pred_fallthru
      _
    // Predicated region
    $region38: #{mirror_critic_forward.1} parent=1 // pred_check
      _
    $region39: #{mirror_critic_forward.1} parent=1 // pred_check_branch
      %45 = sbr.rel (0) target = $region41
    $region40: #{mirror_critic_forward.1} parent=1 // pred_region
      %47 = dma.done [#allocation3], 256
    $region41: #{mirror_critic_forward.1} parent=1 // pred_fallthru
      _
    %v48 = vld [vmem:[%s0] sm:$0xff]
    %v49 = vld [vmem:[#allocation2] sm:$0xff]
    %v50 = vld [vmem:[#allocation2 + $0x8] sm:$0xf]
    %v51 = vld [vmem:[%s1] sm:$0xff]
    %v52 = vld [vmem:[%s3] sm:$0xf]
    %vm53 = vcmask 31744
    %v55 = vsel %vm53, %v51, 0
    %vm57 = vcmask 1043456
    %v59 = vsel %vm57, %v52, 0
    %61 = vmatpush.msra.mxu0 0.0
    %62 = vmatpush.msra.mxu0 0.0
    %63 = vmatpush.msra.mxu0 0.0
    %64 = vmatpush.msra.mxu0 0.0
    %65 = vmatpush.msra.mxu0 0.0
    %66 = vmatpush.msra.mxu0 0.0
    %67 = vmatpush.msra.mxu0 0.0
    %68 = vmatpush.msra.mxu0 0.0
    %69 = vmatpush.msra.mxu0 0.0
    %70 = vmatpush.msra.mxu0 0.0
    %71 = vmatpush.msra.mxu0 0.0
    %72 = vmatpush.msra.mxu0 0.0
    %73 = vmatpush.msra.mxu0 0.0
    %74 = vmatpush.msra.mxu0 0.0
    %75 = vmatpush.msra.mxu0 0.0
    %76 = vmatpush.msra.mxu0 %v59
    %77 = vmatmul.f32.gmra.mxu0 %v55
    %v78 = vpop.f32.mrf.mxu0
    %v79 = vadd.f32 0.0, %v78
    %80 = vdwg.mxu0
    %vm81 = vcmask 97280
    %v83 = vsel %vm81, %v48, 0
    %v86 = vsel %vm57, %v50, 0
    %88 = vmatpush.msra.mxu0 0.0
    %89 = vmatpush.msra.mxu0 0.0
    %90 = vmatpush.msra.mxu0 0.0
    %91 = vmatpush.msra.mxu0 0.0
    %92 = vmatpush.msra.mxu0 0.0
    %93 = vmatpush.msra.mxu0 0.0
    %94 = vmatpush.msra.mxu0 0.0
    %95 = vmatpush.msra.mxu0 0.0
    %96 = vmatpush.msra.mxu0 0.0
    %97 = vmatpush.msra.mxu0 0.0
    %98 = vmatpush.msra.mxu0 0.0
    %99 = vmatpush.msra.mxu0 0.0
    %100 = vmatpush.msra.mxu0 0.0
    %101 = vmatpush.msra.mxu0 0.0
    %102 = vmatpush.msra.mxu0 %v86
    %103 = vmatpush.msra.mxu0 %v49
    %104 = vmatmul.f32.gmra.mxu0 %v83
    %v105 = vpop.f32.mrf.mxu0
    %v106 = vadd.f32 %v79, %v105
    %107 = vdwg.mxu0
    %v108 = vld [vmem:[%s4] sm:$0x1]
    %v110 = vperm.slane %v108, 0
    %v112 = vadd.f32 %v106, %v110
    %v113 = vmax.f32 %v112, 0.0
    %v114 = vld [vmem:[%s5] sm:$0xff]
    %v115 = vld [vmem:[%s5 + $0x8] sm:$0xff]
    %v116 = vld [vmem:[%s5 + $0x10] sm:$0xff]
    %v117 = vld [vmem:[%s5 + $0x18] sm:$0xff]
    %v118 = vld [vmem:[%s5 + $0x20] sm:$0xff]
    %v119 = vld [vmem:[%s5 + $0x28] sm:$0xff]
    %v120 = vld [vmem:[%s5 + $0x30] sm:$0xff]
    %v121 = vld [vmem:[%s5 + $0x38] sm:$0xff]
    %v122 = vld [vmem:[%s6] sm:$0x1]
    %v124 = vperm.slane %v122, 0
    %vm126 = vcmask 523264
    %v128 = vsel %vm126, %v113, 0
    %130 = vmatpush.msra.mxu0 0.0
    %131 = vmatpush.msra.mxu0 0.0
    %132 = vmatpush.msra.mxu0 0.0
    %133 = vmatpush.msra.mxu0 0.0
    %134 = vmatpush.msra.mxu0 0.0
    %135 = vmatpush.msra.mxu0 0.0
    %136 = vmatpush.msra.mxu0 0.0
    %137 = vmatpush.msra.mxu0 0.0
    %138 = vmatpush.msra.mxu0 %v121
    %139 = vmatpush.msra.mxu0 %v120
    %140 = vmatpush.msra.mxu0 %v119
    %141 = vmatpush.msra.mxu0 %v118
    %142 = vmatpush.msra.mxu0 %v117
    %143 = vmatpush.msra.mxu0 %v116
    %144 = vmatpush.msra.mxu0 %v115
    %145 = vmatpush.msra.mxu0 %v114
    %146 = vmatmul.f32.gmra.mxu0 %v128
    %v147 = vpop.f32.mrf.mxu0
    %v148 = vadd.f32 %v124, %v147
    %149 = vdwg.mxu0
    %v150 = vmax.f32 %v148, 0.0
    %v151 = vld [vmem:[%s7] sm:$0xff]
    %v152 = vld [vmem:[%s7 + $0x8] sm:$0xff]
    %v153 = vld [vmem:[%s7 + $0x10] sm:$0xff]
    %v154 = vld [vmem:[%s7 + $0x18] sm:$0xff]
    %v155 = vld [vmem:[%s7 + $0x20] sm:$0xff]
    %v156 = vld [vmem:[%s7 + $0x28] sm:$0xff]
    %v157 = vld [vmem:[%s7 + $0x30] sm:$0xff]
    %v158 = vld [vmem:[%s7 + $0x38] sm:$0xff]
    %v159 = vld [vmem:[%s8] sm:$0x1]
    %v161 = vperm.slane %v159, 0
    %v164 = vsel %vm126, %v150, 0
    %166 = vmatpush.msra.mxu0 0.0
    %167 = vmatpush.msra.mxu0 0.0
    %168 = vmatpush.msra.mxu0 0.0
    %169 = vmatpush.msra.mxu0 0.0
    %170 = vmatpush.msra.mxu0 0.0
    %171 = vmatpush.msra.mxu0 0.0
    %172 = vmatpush.msra.mxu0 0.0
    %173 = vmatpush.msra.mxu0 0.0
    %174 = vmatpush.msra.mxu0 %v158
    %175 = vmatpush.msra.mxu0 %v157
    %176 = vmatpush.msra.mxu0 %v156
    %177 = vmatpush.msra.mxu0 %v155
    %178 = vmatpush.msra.mxu0 %v154
    %179 = vmatpush.msra.mxu0 %v153
    %180 = vmatpush.msra.mxu0 %v152
    %181 = vmatpush.msra.mxu0 %v151
    %182 = vmatmul.f32.gmra.mxu0 %v164
    %v183 = vpop.f32.mrf.mxu0
    %v184 = vadd.f32 %v161, %v183
    %185 = vdwg.mxu0
    %186 = vxpose.xlu0.b32.start [1/16] %v184, 128
    %187 = vxpose.xlu0.b32.cont [2/16] 0.0, 128
    %188 = vxpose.xlu0.b32.cont [3/16] 0.0, 128
    %189 = vxpose.xlu0.b32.cont [4/16] 0.0, 128
    %190 = vxpose.xlu0.b32.cont [5/16] 0.0, 128
    %191 = vxpose.xlu0.b32.cont [6/16] 0.0, 128
    %192 = vxpose.xlu0.b32.cont [7/16] 0.0, 128
    %193 = vxpose.xlu0.b32.cont [8/16] 0.0, 128
    %194 = vxpose.xlu0.b32.cont [9/16] 0.0, 128
    %195 = vxpose.xlu0.b32.cont [10/16] 0.0, 128
    %196 = vxpose.xlu0.b32.cont [11/16] 0.0, 128
    %197 = vxpose.xlu0.b32.cont [12/16] 0.0, 128
    %198 = vxpose.xlu0.b32.cont [13/16] 0.0, 128
    %199 = vxpose.xlu0.b32.cont [14/16] 0.0, 128
    %200 = vxpose.xlu0.b32.cont [15/16] 0.0, 128
    %201 = vxpose.xlu0.b32.end [16/16] 0.0, 128
    %v202 = vpop.trf.xlu0
    %v203 = vpop.trf.xlu0
    %v204 = vpop.trf.xlu0
    %v205 = vpop.trf.xlu0
    %v206 = vpop.trf.xlu0
    %v207 = vpop.trf.xlu0
    %v208 = vpop.trf.xlu0
    %v209 = vpop.trf.xlu0
    %v210 = vpop.trf.xlu0
    %v211 = vpop.trf.xlu0
    %v212 = vpop.trf.xlu0
    %v213 = vpop.trf.xlu0
    %v214 = vpop.trf.xlu0
    %v215 = vpop.trf.xlu0
    %v216 = vpop.trf.xlu0
    %v217 = vpop.trf.xlu0
    %vm218 = vcmask 58368
    %219 = vst.msk [vmem:[%s9] sm:$0x3] %vm218, %v202
    // Predicated region
    $region42: #{mirror_critic_forward.1} parent=1 // pred_check
      _
    $region43: #{mirror_critic_forward.1} parent=1 // pred_check_branch
      %221 = sbr.rel (0) target = $region45
    $region44: #{mirror_critic_forward.1} parent=1 // pred_region
      _
    $region45: #{mirror_critic_forward.1} parent=1 // pred_fallthru
      _
    // Predicated region
    $region46: #{mirror_critic_forward.1} parent=1 // pred_check
      _
    $region47: #{mirror_critic_forward.1} parent=1 // pred_check_branch
      %223 = sbr.rel (0) target = $region49
    $region48: #{mirror_critic_forward.1} parent=1 // pred_region
      _
    $region49: #{mirror_critic_forward.1} parent=1 // pred_fallthru
      _
    %224 = vsyncpa [#allocation3], 1

</llo_original>
